<compile_context>
chip_gen: v7x
topology: tpu7x:2x2x1
jax: 0.10.0
libtpu: 0.0.40
codegen_flags: <defaults>
</compile_context>

<pallas_src>
import jax
import jax.numpy as jnp
from jax.experimental import pallas as pl
from jax.experimental.pallas import tpu as pltpu

# ---- Small, module-consistent configuration -------------------------------
IMAGE_SIZE = 16
PATCH = 4
IN_CH = 4
EMBED = 32
BATCH = 2
EPS = 1e-5                               # nn.BatchNorm2d default eps

PAD = 2 * PATCH                          # conv padding = (2P, 2P)
HP = IMAGE_SIZE + 2 * PAD                # padded spatial = 32
HC = (HP - PATCH) // PATCH + 1           # conv output spatial = 8
HO = HC - PATCH + 1                      # maxpool (k=P, stride=1) output = 5
CPP = IN_CH * PATCH * PATCH              # flattened patch length = 64
NPATCH = BATCH * HC * HC                 # total patches = 128


# ---------------------------------------------------------------------------
# Fused kernel: conv-as-matmul (MXU) + bias + ReLU + separable maxpool + BN
#   patches: (NPATCH, CPP), w: (CPP, E), b/gamma/beta: (1, E)
#   -> out: (B, HO, HO, E)
# ---------------------------------------------------------------------------
def fused_patch_embed_kernel(patches_ref, w_ref, b_ref, gamma_ref, beta_ref,
                             o_ref):
    # --- Conv as a single MXU matmul + bias + ReLU -> (NPATCH, EMBED) ------
    acc = jnp.dot(patches_ref[...], w_ref[...],
                  preferred_element_type=jnp.float32)
    conv = jnp.maximum(acc + b_ref[...], 0.0)

    # (NPATCH, E) -> (B, HC, HC, E). Lane dim (E) unchanged and the 128 rows
    # regroup on 8-sublane tile boundaries, so this reshape is layout-free.
    x = conv.reshape(BATCH, HC, HC, EMBED)

    # --- Separable MaxPool2d(kernel=P, stride=1): W pass, then H pass ------
    t = x[:, :, 0:HO, :]
    for dj in range(1, PATCH):
        t = jnp.maximum(t, x[:, :, dj:dj + HO, :])            # (B, HC, HO, E)
    pooled = t[:, 0:HO, :, :]
    for di in range(1, PATCH):
        pooled = jnp.maximum(pooled, t[:, di:di + HO, :, :])  # (B, HO, HO, E)

    # --- BatchNorm2d, training-mode batch stats, one-pass sum / sumsq ------
    inv_n = 1.0 / float(BATCH * HO * HO)
    s = jnp.sum(pooled, axis=(0, 1, 2), keepdims=True)
    sq = jnp.sum(pooled * pooled, axis=(0, 1, 2), keepdims=True)
    mean = s * inv_n
    var = jnp.maximum(sq * inv_n - mean * mean, 0.0)   # guard tiny negatives
    inv = jax.lax.rsqrt(var + EPS)
    o_ref[...] = (pooled - mean) * inv * gamma_ref[...] + beta_ref[...]
    # TODO(synk): running_mean/running_var momentum buffers are not updated
    # (pure bookkeeping; does not affect the training-mode forward output).


_VMEM_SPEC = pl.BlockSpec(memory_space=pltpu.MemorySpace.VMEM)


# ---------------------------------------------------------------------------
# Wrapper (layout glue: im2col + final NCHW transpose; all under one jit)
# ---------------------------------------------------------------------------
@jax.jit
def patch_embedding_forward(x_nchw, conv_w, conv_b, gamma, beta):
    B, C, H, W = x_nchw.shape
    assert (B, C, H, W) == (BATCH, IN_CH, IMAGE_SIZE, IMAGE_SIZE)

    # im2col: pad by 2P per side, cut into non-overlapping PxP patches.
    xp = jnp.pad(x_nchw, ((0, 0), (0, 0), (PAD, PAD), (PAD, PAD)))
    xp = xp.reshape(B, C, HC, PATCH, HC, PATCH)
    patches = xp.transpose(0, 2, 4, 1, 3, 5).reshape(NPATCH, CPP)

    # conv weight (E, C, P, P) -> (C*P*P, E); flatten order matches patches.
    w_mat = conv_w.reshape(EMBED, CPP).T

    out_nhwc = pl.pallas_call(
        fused_patch_embed_kernel,
        out_shape=jax.ShapeDtypeStruct((BATCH, HO, HO, EMBED), jnp.float32),
        in_specs=[_VMEM_SPEC] * 5,
        out_specs=_VMEM_SPEC,
    )(patches, w_mat,
      conv_b.reshape(1, EMBED),
      gamma.reshape(1, EMBED),
      beta.reshape(1, EMBED))

    # (B, HO, HO, E) -> NCHW to match PyTorch; done in XLA since the 5-wide
    # last dim would make it a badly masked in-kernel write.
    return out_nhwc.transpose(0, 3, 1, 2)


# ---------------------------------------------------------------------------
# Pure-JAX reference (correctness check only)
# ---------------------------------------------------------------------------
def ref_forward(x, conv_w, conv_b, gamma, beta):
    y = jax.lax.conv_general_dilated(
        x, conv_w, window_strides=(PATCH, PATCH),
        padding=((PAD, PAD), (PAD, PAD)),
        dimension_numbers=("NCHW", "OIHW", "NCHW"),
        precision=jax.lax.Precision.HIGHEST)
    y = y + conv_b[None, :, None, None]
    y = jnp.maximum(y, 0.0)
    y = jax.lax.reduce_window(y, -jnp.inf, jax.lax.max,
                              (1, 1, PATCH, PATCH), (1, 1, 1, 1), "VALID")
    mean = jnp.mean(y, axis=(0, 2, 3), keepdims=True)
    var = jnp.mean((y - mean) ** 2, axis=(0, 2, 3), keepdims=True)
    return ((y - mean) * jax.lax.rsqrt(var + EPS)
            * gamma[None, :, None, None] + beta[None, :, None, None])


if __name__ == "__main__":
    key = jax.random.PRNGKey(0)
    k1, k2, k3, k4, k5 = jax.random.split(key, 5)

    x = jax.random.normal(k1, (BATCH, IN_CH, IMAGE_SIZE, IMAGE_SIZE),
                          jnp.float32)
    conv_w = 0.1 * jax.random.normal(k2, (EMBED, IN_CH, PATCH, PATCH),
                                     jnp.float32)
    conv_b = 0.1 * jax.random.normal(k3, (EMBED,), jnp.float32)
    gamma = 1.0 + 0.1 * jax.random.normal(k4, (EMBED,), jnp.float32)
    beta = 0.1 * jax.random.normal(k5, (EMBED,), jnp.float32)

    out = patch_embedding_forward(x, conv_w, conv_b, gamma, beta)
    out = jax.block_until_ready(out)

    ref = jax.block_until_ready(ref_forward(x, conv_w, conv_b, gamma, beta))
    assert out.shape == (BATCH, EMBED, HO, HO), out.shape
    assert jnp.allclose(out, ref, atol=1e-3, rtol=1e-3), \
        float(jnp.max(jnp.abs(out - ref)))

    print("KERNEL_OK")
</pallas_src>

<mosaic_0001>
module attributes {stable_mosaic.version = 11 : i64} {
  func.func @fused_patch_embed_kernel(%arg0: memref<128x64xf32, #tpu.memory_space<vmem>>, %arg1: memref<64x32xf32, #tpu.memory_space<vmem>>, %arg2: memref<1x32xf32, #tpu.memory_space<vmem>>, %arg3: memref<1x32xf32, #tpu.memory_space<vmem>>, %arg4: memref<1x32xf32, #tpu.memory_space<vmem>>, %arg5: memref<2x5x5x32xf32, #tpu.memory_space<vmem>>) attributes {dimension_semantics = [], scalar_prefetch = 0 : i64, scratch_operands = 0 : i64, tpu.core_type = #tpu.core_type<tc>} {
    %c0 = arith.constant 0 : index
    %c0_0 = arith.constant 0 : index
    %0 = vector.load %arg0[%c0, %c0_0] : memref<128x64xf32, #tpu.memory_space<vmem>>, vector<128x64xf32>
    %c0_1 = arith.constant 0 : index
    %c0_2 = arith.constant 0 : index
    %1 = vector.load %arg1[%c0_1, %c0_2] : memref<64x32xf32, #tpu.memory_space<vmem>>, vector<64x32xf32>
    %cst = arith.constant dense<0.000000e+00> : vector<128x32xf32>
    %2 = tpu.matmul %0, %1, %cst {dimension_numbers = #tpu.dot_dimension_numbers<[1], [0], [0], [1], [0, 0, 1, 1], [], []>} : vector<128x64xf32>, vector<64x32xf32>, vector<128x32xf32> -> vector<128x32xf32>
    %c0_3 = arith.constant 0 : index
    %c0_4 = arith.constant 0 : index
    %3 = vector.load %arg2[%c0_3, %c0_4] : memref<1x32xf32, #tpu.memory_space<vmem>>, vector<1x32xf32>
    %4 = vector.broadcast %3 : vector<1x32xf32> to vector<128x32xf32>
    %5 = arith.addf %2, %4 : vector<128x32xf32>
    %cst_5 = arith.constant 0.000000e+00 : f32
    %6 = vector.broadcast %cst_5 : f32 to vector<128x32xf32>
    %7 = arith.maximumf %5, %6 : vector<128x32xf32>
    %8 = vector.shape_cast %7 : vector<128x32xf32> to vector<2x8x8x32xf32>
    %9 = vector.extract_strided_slice %8 {offsets = [0, 0, 0, 0], sizes = [2, 8, 5, 32], strides = [1, 1, 1, 1]} : vector<2x8x8x32xf32> to vector<2x8x5x32xf32>
    %10 = vector.extract_strided_slice %8 {offsets = [0, 0, 1, 0], sizes = [2, 8, 5, 32], strides = [1, 1, 1, 1]} : vector<2x8x8x32xf32> to vector<2x8x5x32xf32>
    %11 = arith.maximumf %9, %10 : vector<2x8x5x32xf32>
    %12 = vector.extract_strided_slice %8 {offsets = [0, 0, 2, 0], sizes = [2, 8, 5, 32], strides = [1, 1, 1, 1]} : vector<2x8x8x32xf32> to vector<2x8x5x32xf32>
    %13 = arith.maximumf %11, %12 : vector<2x8x5x32xf32>
    %14 = vector.extract_strided_slice %8 {offsets = [0, 0, 3, 0], sizes = [2, 8, 5, 32], strides = [1, 1, 1, 1]} : vector<2x8x8x32xf32> to vector<2x8x5x32xf32>
    %15 = arith.maximumf %13, %14 : vector<2x8x5x32xf32>
    %16 = vector.extract_strided_slice %15 {offsets = [0, 0, 0, 0], sizes = [2, 5, 5, 32], strides = [1, 1, 1, 1]} : vector<2x8x5x32xf32> to vector<2x5x5x32xf32>
    %17 = vector.extract_strided_slice %15 {offsets = [0, 1, 0, 0], sizes = [2, 5, 5, 32], strides = [1, 1, 1, 1]} : vector<2x8x5x32xf32> to vector<2x5x5x32xf32>
    %18 = arith.maximumf %16, %17 : vector<2x5x5x32xf32>
    %19 = vector.extract_strided_slice %15 {offsets = [0, 2, 0, 0], sizes = [2, 5, 5, 32], strides = [1, 1, 1, 1]} : vector<2x8x5x32xf32> to vector<2x5x5x32xf32>
    %20 = arith.maximumf %18, %19 : vector<2x5x5x32xf32>
    %21 = vector.extract_strided_slice %15 {offsets = [0, 3, 0, 0], sizes = [2, 5, 5, 32], strides = [1, 1, 1, 1]} : vector<2x8x5x32xf32> to vector<2x5x5x32xf32>
    %22 = arith.maximumf %20, %21 : vector<2x5x5x32xf32>
    %cst_6 = arith.constant dense<0.000000e+00> : vector<32xf32>
    %23 = vector.multi_reduction <add>, %22, %cst_6 [0, 1, 2] : vector<2x5x5x32xf32> to vector<32xf32>
    %24 = vector.shape_cast %23 : vector<32xf32> to vector<1x1x1x32xf32>
    %25 = arith.mulf %22, %22 : vector<2x5x5x32xf32>
    %cst_7 = arith.constant dense<0.000000e+00> : vector<32xf32>
    %26 = vector.multi_reduction <add>, %25, %cst_7 [0, 1, 2] : vector<2x5x5x32xf32> to vector<32xf32>
    %27 = vector.shape_cast %26 : vector<32xf32> to vector<1x1x1x32xf32>
    %cst_8 = arith.constant 2.000000e-02 : f32
    %28 = vector.broadcast %cst_8 : f32 to vector<1x1x1x32xf32>
    %29 = arith.mulf %24, %28 : vector<1x1x1x32xf32>
    %cst_9 = arith.constant 2.000000e-02 : f32
    %30 = vector.broadcast %cst_9 : f32 to vector<1x1x1x32xf32>
    %31 = arith.mulf %27, %30 : vector<1x1x1x32xf32>
    %32 = arith.mulf %29, %29 : vector<1x1x1x32xf32>
    %33 = arith.subf %31, %32 : vector<1x1x1x32xf32>
    %cst_10 = arith.constant 0.000000e+00 : f32
    %34 = vector.broadcast %cst_10 : f32 to vector<1x1x1x32xf32>
    %35 = arith.maximumf %33, %34 : vector<1x1x1x32xf32>
    %cst_11 = arith.constant 9.99999974E-6 : f32
    %36 = vector.broadcast %cst_11 : f32 to vector<1x1x1x32xf32>
    %37 = arith.addf %35, %36 : vector<1x1x1x32xf32>
    %38 = math.rsqrt %37 : vector<1x1x1x32xf32>
    %39 = vector.broadcast %29 : vector<1x1x1x32xf32> to vector<2x5x5x32xf32>
    %40 = arith.subf %22, %39 : vector<2x5x5x32xf32>
    %41 = vector.broadcast %38 : vector<1x1x1x32xf32> to vector<2x5x5x32xf32>
    %42 = arith.mulf %40, %41 : vector<2x5x5x32xf32>
    %c0_12 = arith.constant 0 : index
    %c0_13 = arith.constant 0 : index
    %43 = vector.load %arg3[%c0_12, %c0_13] : memref<1x32xf32, #tpu.memory_space<vmem>>, vector<1x32xf32>
    %44 = vector.shape_cast %43 : vector<1x32xf32> to vector<1x1x1x32xf32>
    %45 = vector.broadcast %44 : vector<1x1x1x32xf32> to vector<2x5x5x32xf32>
    %46 = arith.mulf %42, %45 : vector<2x5x5x32xf32>
    %c0_14 = arith.constant 0 : index
    %c0_15 = arith.constant 0 : index
    %47 = vector.load %arg4[%c0_14, %c0_15] : memref<1x32xf32, #tpu.memory_space<vmem>>, vector<1x32xf32>
    %48 = vector.shape_cast %47 : vector<1x32xf32> to vector<1x1x1x32xf32>
    %49 = vector.broadcast %48 : vector<1x1x1x32xf32> to vector<2x5x5x32xf32>
    %50 = arith.addf %46, %49 : vector<2x5x5x32xf32>
    %c0_16 = arith.constant 0 : index
    %c0_17 = arith.constant 0 : index
    %c0_18 = arith.constant 0 : index
    %c0_19 = arith.constant 0 : index
    %51 = vector.load %arg5[%c0_16, %c0_17, %c0_18, %c0_19] : memref<2x5x5x32xf32, #tpu.memory_space<vmem>>, vector<2x5x5x32xf32>
    tpu.vector_store %arg5[%c0_16, %c0_17, %c0_18, %c0_19], %50 {strides = array<i32>} : memref<2x5x5x32xf32, #tpu.memory_space<vmem>>, vector<2x5x5x32xf32>,
    return
  }
}

</mosaic_0001>

<llo_original>
// kernel: patch_embedding_forward.1
$region0: #{patch_embedding_forward.1}
  #allocation0 [shape = 'u32[]', space=smem, size = 0x4, offset = 0x4, fixed_abs, tag = 'smem constant byte address 0x4 - core index']
  #allocation1 [shape = 'u32[144,128]{1,0:T(1,128)}', space=vmem, size = 0x12000, scoped, tag = 'internal scratch']
  %s0 = inlined_call_operand.vmem [shape: f32[128,64], index: 0, kind: input, shape index: {}]
  %s1 = inlined_call_operand.vmem [shape: f32[64,32], index: 1, kind: input, shape index: {}]
  %s2 = inlined_call_operand.vmem [shape: f32[1,32], index: 2, kind: input, shape index: {}]
  %s3 = inlined_call_operand.vmem [shape: f32[1,32], index: 3, kind: input, shape index: {}]
  %s4 = inlined_call_operand.vmem [shape: f32[1,32], index: 4, kind: input, shape index: {}]
  %s5 = inlined_call_operand.vmem [shape: f32[2,5,5,32], index: 5, kind: output, shape index: {}]
  %s6 = sld [smem:[#allocation0]]
  $region30: #{patch_embedding_forward.1} parent=0
    _
  %s8 = ssub.s32 1, %s6
  %s9 = scalar_select 0, %s8, %s6
  // Predicated region
  $region2: #{patch_embedding_forward.1} parent=0 // pred_check
    _
  $region3: #{patch_embedding_forward.1} parent=0 // pred_check_branch
    %11 = sbr.rel (0) target = $region5
  $region4: #{patch_embedding_forward.1} parent=0 // pred_region
    _
  $region5: #{patch_embedding_forward.1} parent=0 // pred_fallthru
    _
  // Predicated region
  $region6: #{patch_embedding_forward.1} parent=0 // pred_check
    _
  $region7: #{patch_embedding_forward.1} parent=0 // pred_check_branch
    %13 = sbr.rel (0) target = $region9
  $region8: #{patch_embedding_forward.1} parent=0 // pred_region
    _
  $region9: #{patch_embedding_forward.1} parent=0 // pred_fallthru
    _
  // Predicated region
  $region10: #{patch_embedding_forward.1} parent=0 // pred_check
    _
  $region11: #{patch_embedding_forward.1} parent=0 // pred_check_branch
    %15 = sbr.rel (0) target = $region13
  $region12: #{patch_embedding_forward.1} parent=0 // pred_region
    _
  $region13: #{patch_embedding_forward.1} parent=0 // pred_fallthru
    _
  // Predicated region
  $region14: #{patch_embedding_forward.1} parent=0 // pred_check
    _
  $region15: #{patch_embedding_forward.1} parent=0 // pred_check_branch
    %17 = sbr.rel (0) target = $region17
  $region16: #{patch_embedding_forward.1} parent=0 // pred_region
    _
  $region17: #{patch_embedding_forward.1} parent=0 // pred_fallthru
    _
  // Predicated region
  $region18: #{patch_embedding_forward.1} parent=0 // pred_check
    _
  $region19: #{patch_embedding_forward.1} parent=0 // pred_check_branch
    %19 = sbr.rel (0) target = $region21
  $region20: #{patch_embedding_forward.1} parent=0 // pred_region
    _
  $region21: #{patch_embedding_forward.1} parent=0 // pred_fallthru
    _
  %v20 = vld [vmem:[%s0] sm:$0xff]
  %v21 = vld [vmem:[%s0 + $0x8] sm:$0xff]
  %v22 = vld [vmem:[%s0 + $0x10] sm:$0xff]
  %v23 = vld [vmem:[%s0 + $0x18] sm:$0xff]
  %v24 = vld [vmem:[%s0 + $0x20] sm:$0xff]
  %v25 = vld [vmem:[%s0 + $0x28] sm:$0xff]
  %v26 = vld [vmem:[%s0 + $0x30] sm:$0xff]
  %v27 = vld [vmem:[%s0 + $0x38] sm:$0xff]
  %v28 = vld [vmem:[%s0 + $0x40] sm:$0xff]
  %v29 = vld [vmem:[%s0 + $0x48] sm:$0xff]
  %v30 = vld [vmem:[%s0 + $0x50] sm:$0xff]
  %v31 = vld [vmem:[%s0 + $0x58] sm:$0xff]
  %v32 = vld [vmem:[%s0 + $0x60] sm:$0xff]
  %v33 = vld [vmem:[%s0 + $0x68] sm:$0xff]
  %v34 = vld [vmem:[%s0 + $0x70] sm:$0xff]
  %v35 = vld [vmem:[%s0 + $0x78] sm:$0xff]
  %v36 = vld [vmem:[%s1] sm:$0xff]
  %v37 = vld [vmem:[%s1 + $0x8] sm:$0xff]
  %v38 = vld [vmem:[%s1 + $0x10] sm:$0xff]
  %v39 = vld [vmem:[%s1 + $0x18] sm:$0xff]
  %v40 = vld [vmem:[%s1 + $0x20] sm:$0xff]
  %v41 = vld [vmem:[%s1 + $0x28] sm:$0xff]
  %v42 = vld [vmem:[%s1 + $0x30] sm:$0xff]
  %v43 = vld [vmem:[%s1 + $0x38] sm:$0xff]
  %v44 = vld [vmem:[%s2] sm:$0x1]
  %v46 = vlaneseq
  %v47 = vshrl.u32 %v46, 7
  %v48 = vsub.s32 0, %v47
  %v49 = vrot.slane %v44, %v48
  %vm51 = vcmask 523264
  %v53 = vsel %vm51, %v20, 0
  %v56 = vsel %vm51, %v21, 0
  %v59 = vsel %vm51, %v22, 0
  %v62 = vsel %vm51, %v23, 0
  %v65 = vsel %vm51, %v24, 0
  %v68 = vsel %vm51, %v25, 0
  %v71 = vsel %vm51, %v26, 0
  %v74 = vsel %vm51, %v27, 0
  %v77 = vsel %vm51, %v28, 0
  %v80 = vsel %vm51, %v29, 0
  %v83 = vsel %vm51, %v30, 0
  %v86 = vsel %vm51, %v31, 0
  %v89 = vsel %vm51, %v32, 0
  %v92 = vsel %vm51, %v33, 0
  %v95 = vsel %vm51, %v34, 0
  %v98 = vsel %vm51, %v35, 0
  %100 = vmatprep.subr.mxu0 0.0
  %101 = vmatpush1.msra.mxu0 %v36
  %102 = vmatprep.subr.mxu0 0.0
  %103 = vmatpush1.msra.mxu0 %v37
  %104 = vmatprep.subr.mxu0 0.0
  %105 = vmatpush1.msra.mxu0 %v38
  %106 = vmatprep.subr.mxu0 0.0
  %107 = vmatpush1.msra.mxu0 %v39
  %108 = vmatprep.subr.mxu0 0.0
  %109 = vmatpush1.msra.mxu0 %v40
  %110 = vmatprep.subr.mxu0 0.0
  %111 = vmatpush1.msra.mxu0 %v41
  %112 = vmatprep.subr.mxu0 0.0
  %113 = vmatpush1.msra.mxu0 %v42
  %114 = vmatprep.subr.mxu0 0.0
  %115 = vmatpush1.msra.mxu0 %v43
  %116 = vmatprep.subr.mxu0 0.0
  %117 = vmatpush1.msra.mxu0 0.0
  %118 = vmatprep.subr.mxu0 0.0
  %119 = vmatpush1.msra.mxu0 0.0
  %120 = vmatprep.subr.mxu0 0.0
  %121 = vmatpush1.msra.mxu0 0.0
  %122 = vmatprep.subr.mxu0 0.0
  %123 = vmatpush1.msra.mxu0 0.0
  %124 = vmatprep.subr.mxu0 0.0
  %125 = vmatpush1.msra.mxu0 0.0
  %126 = vmatprep.subr.mxu0 0.0
  %127 = vmatpush1.msra.mxu0 0.0
  %128 = vmatprep.subr.mxu0 0.0
  %129 = vmatpush1.msra.mxu0 0.0
  %130 = vmatprep.subr.mxu0 0.0
  %131 = vmatpush1.msra.mxu0 0.0
  %132 = vmatprep.subr.mxu0 0.0
  %133 = vmatpush1.msra.mxu0 0.0
  %134 = vmatprep.subr.mxu0 0.0
  %135 = vmatpush1.msra.mxu0 0.0
  %136 = vmatprep.subr.mxu0 0.0
  %137 = vmatpush1.msra.mxu0 0.0
  %138 = vmatprep.subr.mxu0 0.0
  %139 = vmatpush1.msra.mxu0 0.0
  %140 = vmatprep.subr.mxu0 0.0
  %141 = vmatpush1.msra.mxu0 0.0
  %142 = vmatprep.subr.mxu0 0.0
  %143 = vmatpush1.msra.mxu0 0.0
  %144 = vmatprep.subr.mxu0 0.0
  %145 = vmatpush1.msra.mxu0 0.0
  %146 = vmatprep.subr.mxu0 0.0
  %147 = vmatpush1.msra.mxu0 0.0
  %148 = vmatprep.subr.mxu0 0.0
  %149 = vmatpush1.msra.mxu0 0.0
  %150 = vmatprep.subr.mxu0 0.0
  %151 = vmatpush1.msra.mxu0 0.0
  %152 = vmatprep.subr.mxu0 0.0
  %153 = vmatpush1.msra.mxu0 0.0
  %154 = vmatprep.subr.mxu0 0.0
  %155 = vmatpush1.msra.mxu0 0.0
  %156 = vmatprep.subr.mxu0 0.0
  %157 = vmatpush1.msra.mxu0 0.0
  %158 = vmatprep.subr.mxu0 0.0
  %159 = vmatpush1.msra.mxu0 0.0
  %160 = vmatprep.subr.mxu0 0.0
  %161 = vmatpush1.msra.mxu0 0.0
  %162 = vmatprep.subr.mxu0 0.0
  %163 = vmatpush1.msra.mxu0 0.0
  %164 = vmatprep.mubr.f32.mxu0 0.0
  %165 = vmatmul.mubr.f32.gmra.mrb[0].mxu0 %v53
  %v166 = vpop.f32.mrb[0].mxu0
  %v167 = vadd.f32 %v49, %v166
  %v168 = vpop.f32.mrb[0].mxu0
  %169 = vmatprep.mubr.f32.mxu0 0.0
  %170 = vmatmul.mubr.f32.gmra.mrb[0].mxu0 %v56
  %v171 = vpop.f32.mrb[0].mxu0
  %v172 = vadd.f32 %v49, %v171
  %v173 = vpop.f32.mrb[0].mxu0
  %174 = vmatprep.mubr.f32.mxu0 0.0
  %175 = vmatmul.mubr.f32.gmra.mrb[0].mxu0 %v59
  %v176 = vpop.f32.mrb[0].mxu0
  %v177 = vadd.f32 %v49, %v176
  %v178 = vpop.f32.mrb[0].mxu0
  %179 = vmatprep.mubr.f32.mxu0 0.0
  %180 = vmatmul.mubr.f32.gmra.mrb[0].mxu0 %v62
  %v181 = vpop.f32.mrb[0].mxu0
  %v182 = vadd.f32 %v49, %v181
  %v183 = vpop.f32.mrb[0].mxu0
  %184 = vmatprep.mubr.f32.mxu0 0.0
  %185 = vmatmul.mubr.f32.gmra.mrb[0].mxu0 %v65
  %v186 = vpop.f32.mrb[0].mxu0
  %v187 = vadd.f32 %v49, %v186
  %v188 = vpop.f32.mrb[0].mxu0
  %189 = vmatprep.mubr.f32.mxu0 0.0
  %190 = vmatmul.mubr.f32.gmra.mrb[0].mxu0 %v68
  %v191 = vpop.f32.mrb[0].mxu0
  %v192 = vadd.f32 %v49, %v191
  %v193 = vpop.f32.mrb[0].mxu0
  %194 = vmatprep.mubr.f32.mxu0 0.0
  %195 = vmatmul.mubr.f32.gmra.mrb[0].mxu0 %v71
  %v196 = vpop.f32.mrb[0].mxu0
  %v197 = vadd.f32 %v49, %v196
  %v198 = vpop.f32.mrb[0].mxu0
  %199 = vmatprep.mubr.f32.mxu0 0.0
  %200 = vmatmul.mubr.f32.gmra.mrb[0].mxu0 %v74
  %v201 = vpop.f32.mrb[0].mxu0
  %v202 = vadd.f32 %v49, %v201
  %v203 = vpop.f32.mrb[0].mxu0
  %204 = vmatprep.mubr.f32.mxu0 0.0
  %205 = vmatmul.mubr.f32.gmra.mrb[0].mxu0 %v77
  %v206 = vpop.f32.mrb[0].mxu0
  %v207 = vadd.f32 %v49, %v206
  %v208 = vpop.f32.mrb[0].mxu0
  %209 = vmatprep.mubr.f32.mxu0 0.0
  %210 = vmatmul.mubr.f32.gmra.mrb[0].mxu0 %v80
  %v211 = vpop.f32.mrb[0].mxu0
  %v212 = vadd.f32 %v49, %v211
  %v213 = vpop.f32.mrb[0].mxu0
  %214 = vmatprep.mubr.f32.mxu0 0.0
  %215 = vmatmul.mubr.f32.gmra.mrb[0].mxu0 %v83
  %v216 = vpop.f32.mrb[0].mxu0
  %v217 = vadd.f32 %v49, %v216
  %v218 = vpop.f32.mrb[0].mxu0
  %219 = vmatprep.mubr.f32.mxu0 0.0
  %220 = vmatmul.mubr.f32.gmra.mrb[0].mxu0 %v86
  %v221 = vpop.f32.mrb[0].mxu0
  %v222 = vadd.f32 %v49, %v221
  %v223 = vpop.f32.mrb[0].mxu0
  %224 = vmatprep.mubr.f32.mxu0 0.0
  %225 = vmatmul.mubr.f32.gmra.mrb[0].mxu0 %v89
  %v226 = vpop.f32.mrb[0].mxu0
  %v227 = vadd.f32 %v49, %v226
  %v228 = vpop.f32.mrb[0].mxu0
  %229 = vmatprep.mubr.f32.mxu0 0.0
  %230 = vmatmul.mubr.f32.gmra.mrb[0].mxu0 %v92
  %v231 = vpop.f32.mrb[0].mxu0
  %v232 = vadd.f32 %v49, %v231
  %v233 = vpop.f32.mrb[0].mxu0
  %234 = vmatprep.mubr.f32.mxu0 0.0
  %235 = vmatmul.mubr.f32.gmra.mrb[0].mxu0 %v95
  %v236 = vpop.f32.mrb[0].mxu0
  %v237 = vadd.f32 %v49, %v236
  %v238 = vpop.f32.mrb[0].mxu0
  %239 = vmatprep.mubr.f32.mxu0 0.0
  %240 = vmatmul.mubr.f32.gmra.mrb[0].mxu0 %v98
  %v241 = vpop.f32.mrb[0].mxu0
  %v242 = vadd.f32 %v49, %v241
  %v243 = vpop.f32.mrb[0].mxu0
  %244 = vdwg.mxu0
  %v245 = vmax.f32 %v167, 0.0
  %v246 = vmax.f32 %v172, 0.0
  %v247 = vmax.f32 %v177, 0.0
  %v248 = vmax.f32 %v182, 0.0
  %v249 = vmax.f32 %v187, 0.0
  %v250 = vmax.f32 %v192, 0.0
  %v251 = vmax.f32 %v197, 0.0
  %v252 = vmax.f32 %v202, 0.0
  %v253 = vmax.f32 %v207, 0.0
  %v254 = vmax.f32 %v212, 0.0
  %v255 = vmax.f32 %v217, 0.0
  %v256 = vmax.f32 %v222, 0.0
  %v257 = vmax.f32 %v227, 0.0
  %v258 = vmax.f32 %v232, 0.0
  %v259 = vmax.f32 %v237, 0.0
  %v260 = vmax.f32 %v242, 0.0
  %v277 = vrot.slane %v245, 1
  %v278 = vrot.slane %v246, 1
  %v279 = vrot.slane %v247, 1
  %v280 = vrot.slane %v248, 1
  %v281 = vrot.slane %v249, 1
  %v282 = vrot.slane %v250, 1
  %v283 = vrot.slane %v251, 1
  %v284 = vrot.slane %v252, 1
  %v285 = vrot.slane %v253, 1
  %v286 = vrot.slane %v254, 1
  %v287 = vrot.slane %v255, 1
  %v288 = vrot.slane %v256, 1
  %v289 = vrot.slane %v257, 1
  %v290 = vrot.slane %v258, 1
  %v291 = vrot.slane %v259, 1
  %v292 = vrot.slane %v260, 1
  %v309 = vmax.f32 %v245, %v277
  %v310 = vmax.f32 %v246, %v278
  %v311 = vmax.f32 %v247, %v279
  %v312 = vmax.f32 %v248, %v280
  %v313 = vmax.f32 %v249, %v281
  %v314 = vmax.f32 %v250, %v282
  %v315 = vmax.f32 %v251, %v283
  %v316 = vmax.f32 %v252, %v284
  %v317 = vmax.f32 %v253, %v285
  %v318 = vmax.f32 %v254, %v286
  %v319 = vmax.f32 %v255, %v287
  %v320 = vmax.f32 %v256, %v288
  %v321 = vmax.f32 %v257, %v289
  %v322 = vmax.f32 %v258, %v290
  %v323 = vmax.f32 %v259, %v291
  %v324 = vmax.f32 %v260, %v292
  %v325 = vrot.slane %v245, 2
  %v326 = vrot.slane %v246, 2
  %v327 = vrot.slane %v247, 2
  %v328 = vrot.slane %v248, 2
  %v329 = vrot.slane %v249, 2
  %v330 = vrot.slane %v250, 2
  %v331 = vrot.slane %v251, 2
  %v332 = vrot.slane %v252, 2
  %v333 = vrot.slane %v253, 2
  %v334 = vrot.slane %v254, 2
  %v335 = vrot.slane %v255, 2
  %v336 = vrot.slane %v256, 2
  %v337 = vrot.slane %v257, 2
  %v338 = vrot.slane %v258, 2
  %v339 = vrot.slane %v259, 2
  %v340 = vrot.slane %v260, 2
  %v357 = vmax.f32 %v309, %v325
  %v358 = vmax.f32 %v310, %v326
  %v359 = vmax.f32 %v311, %v327
  %v360 = vmax.f32 %v312, %v328
  %v361 = vmax.f32 %v313, %v329
  %v362 = vmax.f32 %v314, %v330
  %v363 = vmax.f32 %v315, %v331
  %v364 = vmax.f32 %v316, %v332
  %v365 = vmax.f32 %v317, %v333
  %v366 = vmax.f32 %v318, %v334
  %v367 = vmax.f32 %v319, %v335
  %v368 = vmax.f32 %v320, %v336
  %v369 = vmax.f32 %v321, %v337
  %v370 = vmax.f32 %v322, %v338
  %v371 = vmax.f32 %v323, %v339
  %v372 = vmax.f32 %v324, %v340
  %v373 = vrot.slane %v245, 3
  %v374 = vrot.slane %v246, 3
  %v375 = vrot.slane %v247, 3
  %v376 = vrot.slane %v248, 3
  %v377 = vrot.slane %v249, 3
  %v378 = vrot.slane %v250, 3
  %v379 = vrot.slane %v251, 3
  %v380 = vrot.slane %v252, 3
  %v381 = vrot.slane %v253, 3
  %v382 = vrot.slane %v254, 3
  %v383 = vrot.slane %v255, 3
  %v384 = vrot.slane %v256, 3
  %v385 = vrot.slane %v257, 3
  %v386 = vrot.slane %v258, 3
  %v387 = vrot.slane %v259, 3
  %v388 = vrot.slane %v260, 3
  %v405 = vmax.f32 %v357, %v373
  %v406 = vmax.f32 %v358, %v374
  %v407 = vmax.f32 %v359, %v375
  %v408 = vmax.f32 %v360, %v376
  %v409 = vmax.f32 %v361, %v377
  %v410 = vmax.f32 %v362, %v378
  %v411 = vmax.f32 %v363, %v379
  %v412 = vmax.f32 %v364, %v380
  %v413 = vmax.f32 %v365, %v381
  %v414 = vmax.f32 %v366, %v382
  %v415 = vmax.f32 %v367, %v383
  %v416 = vmax.f32 %v368, %v384
  %v417 = vmax.f32 %v369, %v385
  %v418 = vmax.f32 %v370, %v386
  %v419 = vmax.f32 %v371, %v387
  %v420 = vmax.f32 %v372, %v388
  %v421 = vmax.f32 %v405, %v406
  %v422 = vmax.f32 %v406, %v407
  %v423 = vmax.f32 %v407, %v408
  %v424 = vmax.f32 %v408, %v409
  %v425 = vmax.f32 %v409, %v410
  %v426 = vmax.f32 %v413, %v414
  %v427 = vmax.f32 %v414, %v415
  %v428 = vmax.f32 %v415, %v416
  %v429 = vmax.f32 %v416, %v417
  %v430 = vmax.f32 %v417, %v418
  %v431 = vmax.f32 %v421, %v407
  %v432 = vmax.f32 %v422, %v408
  %v433 = vmax.f32 %v423, %v409
  %v434 = vmax.f32 %v424, %v410
  %v435 = vmax.f32 %v425, %v411
  %v436 = vmax.f32 %v426, %v415
  %v437 = vmax.f32 %v427, %v416
  %v438 = vmax.f32 %v428, %v417
  %v439 = vmax.f32 %v429, %v418
  %v440 = vmax.f32 %v430, %v419
  %v441 = vmax.f32 %v431, %v408
  %v442 = vmax.f32 %v432, %v409
  %v443 = vmax.f32 %v433, %v410
  %v444 = vmax.f32 %v434, %v411
  %v445 = vmax.f32 %v435, %v412
  %v446 = vmax.f32 %v436, %v416
  %v447 = vmax.f32 %v437, %v417
  %v448 = vmax.f32 %v438, %v418
  %v449 = vmax.f32 %v439, %v419
  %v450 = vmax.f32 %v440, %v420
  %vm451 = vcmask 258048
  %v452 = vsel %vm451, %v441, 0.0
  %v453 = vsel %vm451, %v442, 0.0
  %v454 = vadd.f32 %v452, %v453
  %v455 = vsel %vm451, %v443, 0.0
  %v456 = vadd.f32 %v454, %v455
  %v457 = vsel %vm451, %v444, 0.0
  %v458 = vadd.f32 %v456, %v457
  %v459 = vsel %vm451, %v445, 0.0
  %v460 = vadd.f32 %v458, %v459
  %v461 = vsel %vm451, %v446, 0.0
  %v462 = vadd.f32 %v460, %v461
  %v463 = vsel %vm451, %v447, 0.0
  %v464 = vadd.f32 %v462, %v463
  %v465 = vsel %vm451, %v448, 0.0
  %v466 = vadd.f32 %v464, %v465
  %v467 = vsel %vm451, %v449, 0.0
  %v468 = vadd.f32 %v466, %v467
  %v469 = vsel %vm451, %v450, 0.0
  %v470 = vadd.f32 %v468, %v469
  %v471 = vrot.slane %v470, 4
  %v472 = vadd.f32 %v470, %v471
  %v473 = vrot.slane %v472, 2
  %v474 = vadd.f32 %v472, %v473
  %v475 = vrot.slane %v474, 1
  %v476 = vadd.f32 %v474, %v475
  %v477 = vmul.f32 %v441, %v441
  %v478 = vmul.f32 %v442, %v442
  %v479 = vmul.f32 %v443, %v443
  %v480 = vmul.f32 %v444, %v444
  %v481 = vmul.f32 %v445, %v445
  %v482 = vmul.f32 %v446, %v446
  %v483 = vmul.f32 %v447, %v447
  %v484 = vmul.f32 %v448, %v448
  %v485 = vmul.f32 %v449, %v449
  %v486 = vmul.f32 %v450, %v450
  %v487 = vsel %vm451, %v477, 0.0
  %v488 = vsel %vm451, %v478, 0.0
  %v489 = vadd.f32 %v487, %v488
  %v490 = vsel %vm451, %v479, 0.0
  %v491 = vadd.f32 %v489, %v490
  %v492 = vsel %vm451, %v480, 0.0
  %v493 = vadd.f32 %v491, %v492
  %v494 = vsel %vm451, %v481, 0.0
  %v495 = vadd.f32 %v493, %v494
  %v496 = vsel %vm451, %v482, 0.0
  %v497 = vadd.f32 %v495, %v496
  %v498 = vsel %vm451, %v483, 0.0
  %v499 = vadd.f32 %v497, %v498
  %v500 = vsel %vm451, %v484, 0.0
  %v501 = vadd.f32 %v499, %v500
  %v502 = vsel %vm451, %v485, 0.0
  %v503 = vadd.f32 %v501, %v502
  %v504 = vsel %vm451, %v486, 0.0
  %v505 = vadd.f32 %v503, %v504
  %v506 = vrot.slane %v505, 4
  %v507 = vadd.f32 %v505, %v506
  %v508 = vrot.slane %v507, 2
  %v509 = vadd.f32 %v507, %v508
  %v510 = vrot.slane %v509, 1
  %v511 = vadd.f32 %v509, %v510
  %v512 = vmul.f32 %v476, 0.02
  %v513 = vmul.f32 %v511, 0.02
  %v514 = vmul.f32 %v512, %v512
  %v515 = vsub.f32 %v513, %v514
  %v516 = vmax.f32 %v515, 0.0
  %v517 = vadd.f32 %v516, 1e-05
  %v518 = vrsqrt.pop %v517
  %v519 = vsub.f32 %v441, %v512
  %v520 = vsub.f32 %v442, %v512
  %v521 = vsub.f32 %v443, %v512
  %v522 = vsub.f32 %v444, %v512
  %v523 = vsub.f32 %v445, %v512
  %v524 = vsub.f32 %v446, %v512
  %v525 = vsub.f32 %v447, %v512
  %v526 = vsub.f32 %v448, %v512
  %v527 = vsub.f32 %v449, %v512
  %v528 = vsub.f32 %v450, %v512
  %v529 = vmul.f32 %v519, %v518
  %v530 = vmul.f32 %v520, %v518
  %v531 = vmul.f32 %v521, %v518
  %v532 = vmul.f32 %v522, %v518
  %v533 = vmul.f32 %v523, %v518
  %v534 = vmul.f32 %v524, %v518
  %v535 = vmul.f32 %v525, %v518
  %v536 = vmul.f32 %v526, %v518
  %v537 = vmul.f32 %v527, %v518
  %v538 = vmul.f32 %v528, %v518
  %v539 = vld [vmem:[%s3] sm:$0x1]
  %v541 = vlaneseq
  %v542 = vshrl.u32 %v541, 7
  %v543 = vsub.s32 0, %v542
  %v544 = vrot.slane %v539, %v543
  %v546 = vmul.f32 %v529, %v544
  %v547 = vmul.f32 %v530, %v544
  %v548 = vmul.f32 %v531, %v544
  %v549 = vmul.f32 %v532, %v544
  %v550 = vmul.f32 %v533, %v544
  %v551 = vmul.f32 %v534, %v544
  %v552 = vmul.f32 %v535, %v544
  %v553 = vmul.f32 %v536, %v544
  %v554 = vmul.f32 %v537, %v544
  %v555 = vmul.f32 %v538, %v544
  %v556 = vld [vmem:[%s4] sm:$0x1]
  %v558 = vlaneseq
  %v559 = vshrl.u32 %v558, 7
  %v560 = vsub.s32 0, %v559
  %v561 = vrot.slane %v556, %v560
  %v563 = vadd.f32 %v546, %v561
  %v564 = vadd.f32 %v547, %v561
  %v565 = vadd.f32 %v548, %v561
  %v566 = vadd.f32 %v549, %v561
  %v567 = vadd.f32 %v550, %v561
  %v568 = vadd.f32 %v551, %v561
  %v569 = vadd.f32 %v552, %v561
  %v570 = vadd.f32 %v553, %v561
  %v571 = vadd.f32 %v554, %v561
  %v572 = vadd.f32 %v555, %v561
  %573 = vst.msk [vmem:[%s5] sm:$0x1f] %vm451, %v563
  %574 = vst.msk [vmem:[%s5 + $0x8] sm:$0x1f] %vm451, %v564
  %575 = vst.msk [vmem:[%s5 + $0x10] sm:$0x1f] %vm451, %v565
  %576 = vst.msk [vmem:[%s5 + $0x18] sm:$0x1f] %vm451, %v566
  %577 = vst.msk [vmem:[%s5 + $0x20] sm:$0x1f] %vm451, %v567
  %578 = vst.msk [vmem:[%s5 + $0x28] sm:$0x1f] %vm451, %v568
  %579 = vst.msk [vmem:[%s5 + $0x30] sm:$0x1f] %vm451, %v569
  %580 = vst.msk [vmem:[%s5 + $0x38] sm:$0x1f] %vm451, %v570
  %581 = vst.msk [vmem:[%s5 + $0x40] sm:$0x1f] %vm451, %v571
  %582 = vst.msk [vmem:[%s5 + $0x48] sm:$0x1f] %vm451, %v572
  // Predicated region
  $region22: #{patch_embedding_forward.1} parent=0 // pred_check
    _
  $region23: #{patch_embedding_forward.1} parent=0 // pred_check_branch
    %584 = sbr.rel (0) target = $region25
  $region24: #{patch_embedding_forward.1} parent=0 // pred_region
    _
  $region25: #{patch_embedding_forward.1} parent=0 // pred_fallthru
    _
  // Predicated region
  $region26: #{patch_embedding_forward.1} parent=0 // pred_check
    _
  $region27: #{patch_embedding_forward.1} parent=0 // pred_check_branch
    %586 = sbr.rel (0) target = $region29
  $region28: #{patch_embedding_forward.1} parent=0 // pred_region
    _
  $region29: #{patch_embedding_forward.1} parent=0 // pred_fallthru
    _

</llo_original>
